<compile_context>
chip_gen: v5e
topology: v5e:2x2
jax: 0.10.0
libtpu: 0.0.40
codegen_flags: <defaults>
</compile_context>

<pallas_src>
import functools

import jax
import jax.numpy as jnp
from jax.experimental import pallas as pl
from jax.experimental.pallas import tpu as pltpu


_LANE = 128
_SUBLANE = 8


def _round_up(n, m):
    return ((n + m - 1) // m) * m


def _discriminator_kernel(x_ref, h_ref, w1a_ref, w1b_ref, b1_ref,
                          w2_ref, b2_ref, w3_ref, b3_ref, out_ref):
    # Activations cast to bf16 for the MXU; accumulation + epilogue in f32.
    x = x_ref[...].astype(jnp.bfloat16)
    h = h_ref[...].astype(jnp.bfloat16)

    # Layer 1 -- fused torch.cat([x, h], 1) @ W1.T:  x@W1a + h@W1b + b1
    z1 = (jnp.dot(x, w1a_ref[...], preferred_element_type=jnp.float32)
          + jnp.dot(h, w1b_ref[...], preferred_element_type=jnp.float32)
          + b1_ref[...])
    a1 = jnp.maximum(z1, 0.0).astype(jnp.bfloat16)

    # Layer 2
    z2 = jnp.dot(a1, w2_ref[...], preferred_element_type=jnp.float32) + b2_ref[...]
    a2 = jnp.maximum(z2, 0.0).astype(jnp.bfloat16)

    # Layer 3 + sigmoid: exp (EUP) + approximate reciprocal (EUP vrcp)
    z3 = jnp.dot(a2, w3_ref[...], preferred_element_type=jnp.float32) + b3_ref[...]
    p = pl.reciprocal(1.0 + jnp.exp(-z3), approx=True)
    out_ref[...] = p.astype(out_ref.dtype)


def prepare_params(params, d_x):
    """One-time param prep: split W1 for the fused concat, zero-pad feature
    dims to 128 lanes, cast weights to bf16 (biases stay f32).

    params: (w1, b1, w2, b2, w3, b3) with weights stored (in_features,
    out_features) -- i.e. already W.T relative to nn.Linear -- and biases
    shaped (1, out_features).
    """
    w1, b1, w2, b2, w3, b3 = params
    in_channels, hidden = w1.shape
    out_channels = w3.shape[1]
    d_h = in_channels - d_x

    h_pad = _round_up(hidden, _LANE)
    o_pad = _round_up(out_channels, _LANE)

    def pad2(a, rows, cols):
        return jnp.pad(a, ((0, rows - a.shape[0]), (0, cols - a.shape[1])))

    w1a = pad2(w1[:d_x], d_x, h_pad).astype(jnp.bfloat16)    # (Dx, Hp)
    w1b = pad2(w1[d_x:], d_h, h_pad).astype(jnp.bfloat16)    # (Dh, Hp)
    b1p = pad2(b1, 1, h_pad).astype(jnp.float32)             # (1, Hp)
    w2p = pad2(w2, h_pad, h_pad).astype(jnp.bfloat16)        # (Hp, Hp)
    b2p = pad2(b2, 1, h_pad).astype(jnp.float32)             # (1, Hp)
    w3p = pad2(w3, h_pad, o_pad).astype(jnp.bfloat16)        # (Hp, Op)
    b3p = pad2(b3, 1, o_pad).astype(jnp.float32)             # (1, Op)
    return (w1a, w1b, b1p, w2p, b2p, w3p, b3p), out_channels


@functools.partial(jax.jit, static_argnames=("out_channels",))
def discriminator_forward(x, h, prepared, out_channels):
    """x: (B, Dx), h: (B, Dh)  ->  Mask_prob: (B, out_channels), float32."""
    w1a, w1b, b1, w2, b2, w3, b3 = prepared
    B, d_x = x.shape
    d_h = h.shape[1]
    h_pad = w1a.shape[1]
    o_pad = w3.shape[1]

    # Batch tile: full batch when small, otherwise 512-row tiles (multiple of
    # 8 sublanes; activation + output double-buffers stay far below the v7x
    # 64 MiB VMEM budget even with all weights resident).
    tb = B if B <= 512 else 512
    grid = (pl.cdiv(B, tb),)

    act_spec = lambda cols: pl.BlockSpec((tb, cols), lambda i: (i, 0))
    res_spec = lambda shape: pl.BlockSpec(shape, lambda i: (0, 0))  # VMEM-resident

    flops = 2 * B * ((d_x + d_h) * h_pad + h_pad * h_pad + h_pad * o_pad)
    bytes_accessed = (
        (x.size + h.size) * 4
        + (w1a.size + w1b.size + w2.size + w3.size) * 2
        + (b1.size + b2.size + b3.size) * 4
        + B * o_pad * 4)

    out_padded = pl.pallas_call(
        _discriminator_kernel,
        out_shape=jax.ShapeDtypeStruct((B, o_pad), jnp.float32),
        grid=grid,
        in_specs=[
            act_spec(d_x),                 # x
            act_spec(d_h),                 # h (hint matrix)
            res_spec((d_x, h_pad)),        # w1a
            res_spec((d_h, h_pad)),        # w1b
            res_spec((1, h_pad)),          # b1
            res_spec((h_pad, h_pad)),      # w2
            res_spec((1, h_pad)),          # b2
            res_spec((h_pad, o_pad)),      # w3
            res_spec((1, o_pad)),          # b3
        ],
        out_specs=act_spec(o_pad),
        compiler_params=pltpu.CompilerParams(
            dimension_semantics=("parallel",)),
        cost_estimate=pl.CostEstimate(
            flops=flops,
            transcendentals=B * o_pad,
            bytes_accessed=bytes_accessed),
    )(x, h, w1a, w1b, b1, w2, b2, w3, b3)

    # Slice padded lanes back to the true output width.
    return out_padded[:, :out_channels]


def init_params(key, in_channels, hidden_channels, out_channels):
    """Deterministic synthetic init (Kaiming-uniform-ish like nn.Linear).

    Weights are stored as (in_features, out_features), i.e. already W.T
    relative to PyTorch's nn.Linear weight layout.
    """
    ks = jax.random.split(key, 6)

    def linear(kw, kb, fan_in, fan_out):
        bound = 1.0 / jnp.sqrt(fan_in)
        w = jax.random.uniform(kw, (fan_in, fan_out), jnp.float32, -bound, bound)
        b = jax.random.uniform(kb, (1, fan_out), jnp.float32, -bound, bound)
        return w, b

    w1, b1 = linear(ks[0], ks[1], in_channels, hidden_channels)
    w2, b2 = linear(ks[2], ks[3], hidden_channels, hidden_channels)
    w3, b3 = linear(ks[4], ks[5], hidden_channels, out_channels)
    return (w1, b1, w2, b2, w3, b3)


def reference_forward(x, h, params):
    w1, b1, w2, b2, w3, b3 = params
    inputs = jnp.concatenate([x, h], axis=1)
    h1 = jax.nn.relu(inputs @ w1 + b1)
    h2 = jax.nn.relu(h1 @ w2 + b2)
    return jax.nn.sigmoid(h2 @ w3 + b3)


if __name__ == "__main__":
    key = jax.random.PRNGKey(0)
    k_x, k_h, k_p = jax.random.split(key, 3)

    # GAIN convention: data dim D, x and h each (B, D); in_channels = 2*D.
    B, D = 8, 16
    in_channels, hidden_channels, out_channels = 2 * D, 32, D

    x = jax.random.normal(k_x, (B, D), jnp.float32)
    h = (jax.random.uniform(k_h, (B, D)) > 0.5).astype(jnp.float32)  # hint matrix

    params = init_params(k_p, in_channels, hidden_channels, out_channels)
    prepared, n_out = prepare_params(params, d_x=D)

    out = discriminator_forward(x, h, prepared, out_channels=n_out)
    out = jax.block_until_ready(out)

    ref = reference_forward(x, h, params)
    assert out.shape == (B, out_channels)
    # bf16 matmul (f32 accumulate) + approx EUP reciprocal -> loose tolerance
    assert jnp.allclose(out, ref, atol=2e-2, rtol=2e-2), "mismatch vs JAX reference"

    print("KERNEL_OK")
</pallas_src>

<mosaic_0001>
module attributes {stable_mosaic.version = 11 : i64} {
  func.func @_discriminator_kernel(%arg0: i32, %arg1: memref<8x16xf32, #tpu.memory_space<vmem>>, %arg2: memref<8x16xf32, #tpu.memory_space<vmem>>, %arg3: memref<16x128xbf16, #tpu.memory_space<vmem>>, %arg4: memref<16x128xbf16, #tpu.memory_space<vmem>>, %arg5: memref<1x128xf32, #tpu.memory_space<vmem>>, %arg6: memref<128x128xbf16, #tpu.memory_space<vmem>>, %arg7: memref<1x128xf32, #tpu.memory_space<vmem>>, %arg8: memref<128x128xbf16, #tpu.memory_space<vmem>>, %arg9: memref<1x128xf32, #tpu.memory_space<vmem>>, %arg10: memref<8x128xf32, #tpu.memory_space<vmem>>) attributes {dimension_semantics = [#tpu.dimension_semantics<parallel>], iteration_bounds = array<i64: 1>, scalar_prefetch = 0 : i64, scratch_operands = 0 : i64, tpu.core_type = #tpu.core_type<tc>, window_params = [{transform_indices = @transform_0, window_bounds = array<i64: 8, 16>}, {transform_indices = @transform_1, window_bounds = array<i64: 8, 16>}, {pipeline_mode = #tpu.pipeline_mode<synchronous>, transform_indices = @transform_2, window_bounds = array<i64: 16, 128>}, {pipeline_mode = #tpu.pipeline_mode<synchronous>, transform_indices = @transform_3, window_bounds = array<i64: 16, 128>}, {pipeline_mode = #tpu.pipeline_mode<synchronous>, transform_indices = @transform_4, window_bounds = array<i64: 1, 128>}, {pipeline_mode = #tpu.pipeline_mode<synchronous>, transform_indices = @transform_5, window_bounds = array<i64: 128, 128>}, {pipeline_mode = #tpu.pipeline_mode<synchronous>, transform_indices = @transform_6, window_bounds = array<i64: 1, 128>}, {pipeline_mode = #tpu.pipeline_mode<synchronous>, transform_indices = @transform_7, window_bounds = array<i64: 128, 128>}, {pipeline_mode = #tpu.pipeline_mode<synchronous>, transform_indices = @transform_8, window_bounds = array<i64: 1, 128>}, {transform_indices = @transform_9, window_bounds = array<i64: 8, 128>}]} {
    %c0 = arith.constant 0 : index
    %c0_0 = arith.constant 0 : index
    %0 = vector.load %arg1[%c0, %c0_0] : memref<8x16xf32, #tpu.memory_space<vmem>>, vector<8x16xf32>
    %1 = arith.truncf %0 : vector<8x16xf32> to vector<8x16xbf16>
    %c0_1 = arith.constant 0 : index
    %c0_2 = arith.constant 0 : index
    %2 = vector.load %arg2[%c0_1, %c0_2] : memref<8x16xf32, #tpu.memory_space<vmem>>, vector<8x16xf32>
    %3 = arith.truncf %2 : vector<8x16xf32> to vector<8x16xbf16>
    %c0_3 = arith.constant 0 : index
    %c0_4 = arith.constant 0 : index
    %4 = vector.load %arg3[%c0_3, %c0_4] : memref<16x128xbf16, #tpu.memory_space<vmem>>, vector<16x128xbf16>
    %cst = arith.constant dense<0.000000e+00> : vector<8x128xf32>
    %5 = tpu.matmul %1, %4, %cst {dimension_numbers = #tpu.dot_dimension_numbers<[1], [0], [0], [1], [0, 0, 1, 1], [], []>} : vector<8x16xbf16>, vector<16x128xbf16>, vector<8x128xf32> -> vector<8x128xf32>
    %c0_5 = arith.constant 0 : index
    %c0_6 = arith.constant 0 : index
    %6 = vector.load %arg4[%c0_5, %c0_6] : memref<16x128xbf16, #tpu.memory_space<vmem>>, vector<16x128xbf16>
    %cst_7 = arith.constant dense<0.000000e+00> : vector<8x128xf32>
    %7 = tpu.matmul %3, %6, %cst_7 {dimension_numbers = #tpu.dot_dimension_numbers<[1], [0], [0], [1], [0, 0, 1, 1], [], []>} : vector<8x16xbf16>, vector<16x128xbf16>, vector<8x128xf32> -> vector<8x128xf32>
    %8 = arith.addf %5, %7 : vector<8x128xf32>
    %c0_8 = arith.constant 0 : index
    %c0_9 = arith.constant 0 : index
    %9 = vector.load %arg5[%c0_8, %c0_9] : memref<1x128xf32, #tpu.memory_space<vmem>>, vector<1x128xf32>
    %10 = vector.broadcast %9 : vector<1x128xf32> to vector<8x128xf32>
    %11 = arith.addf %8, %10 : vector<8x128xf32>
    %cst_10 = arith.constant 0.000000e+00 : f32
    %12 = vector.broadcast %cst_10 : f32 to vector<8x128xf32>
    %13 = arith.maximumf %11, %12 : vector<8x128xf32>
    %14 = arith.truncf %13 : vector<8x128xf32> to vector<8x128xbf16>
    %c0_11 = arith.constant 0 : index
    %c0_12 = arith.constant 0 : index
    %15 = vector.load %arg6[%c0_11, %c0_12] : memref<128x128xbf16, #tpu.memory_space<vmem>>, vector<128x128xbf16>
    %cst_13 = arith.constant dense<0.000000e+00> : vector<8x128xf32>
    %16 = tpu.matmul %14, %15, %cst_13 {dimension_numbers = #tpu.dot_dimension_numbers<[1], [0], [0], [1], [0, 0, 1, 1], [], []>} : vector<8x128xbf16>, vector<128x128xbf16>, vector<8x128xf32> -> vector<8x128xf32>
    %c0_14 = arith.constant 0 : index
    %c0_15 = arith.constant 0 : index
    %17 = vector.load %arg7[%c0_14, %c0_15] : memref<1x128xf32, #tpu.memory_space<vmem>>, vector<1x128xf32>
    %18 = vector.broadcast %17 : vector<1x128xf32> to vector<8x128xf32>
    %19 = arith.addf %16, %18 : vector<8x128xf32>
    %cst_16 = arith.constant 0.000000e+00 : f32
    %20 = vector.broadcast %cst_16 : f32 to vector<8x128xf32>
    %21 = arith.maximumf %19, %20 : vector<8x128xf32>
    %22 = arith.truncf %21 : vector<8x128xf32> to vector<8x128xbf16>
    %c0_17 = arith.constant 0 : index
    %c0_18 = arith.constant 0 : index
    %23 = vector.load %arg8[%c0_17, %c0_18] : memref<128x128xbf16, #tpu.memory_space<vmem>>, vector<128x128xbf16>
    %cst_19 = arith.constant dense<0.000000e+00> : vector<8x128xf32>
    %24 = tpu.matmul %22, %23, %cst_19 {dimension_numbers = #tpu.dot_dimension_numbers<[1], [0], [0], [1], [0, 0, 1, 1], [], []>} : vector<8x128xbf16>, vector<128x128xbf16>, vector<8x128xf32> -> vector<8x128xf32>
    %c0_20 = arith.constant 0 : index
    %c0_21 = arith.constant 0 : index
    %25 = vector.load %arg9[%c0_20, %c0_21] : memref<1x128xf32, #tpu.memory_space<vmem>>, vector<1x128xf32>
    %26 = vector.broadcast %25 : vector<1x128xf32> to vector<8x128xf32>
    %27 = arith.addf %24, %26 : vector<8x128xf32>
    %cst_22 = arith.constant 0.000000e+00 : f32
    %28 = vector.broadcast %cst_22 : f32 to vector<8x128xf32>
    %29 = arith.subf %28, %27 : vector<8x128xf32>
    %30 = math.exp %29 : vector<8x128xf32>
    %cst_23 = arith.constant 1.000000e+00 : f32
    %31 = vector.broadcast %cst_23 : f32 to vector<8x128xf32>
    %32 = arith.addf %31, %30 : vector<8x128xf32>
    %33 = tpu.reciprocal %32 {approx = true} : vector<8x128xf32> -> vector<8x128xf32>
    %c0_24 = arith.constant 0 : index
    %c0_25 = arith.constant 0 : index
    %34 = vector.load %arg10[%c0_24, %c0_25] : memref<8x128xf32, #tpu.memory_space<vmem>>, vector<8x128xf32>
    tpu.vector_store %arg10[%c0_24, %c0_25], %33 {strides = array<i32>} : memref<8x128xf32, #tpu.memory_space<vmem>>, vector<8x128xf32>,
    return
  }
  func.func @transform_0(%arg0: i32) -> (i32, i32) {
    %c0_i32 = arith.constant 0 : i32
    %c0_i32_0 = arith.constant 0 : i32
    return %arg0, %c0_i32 : i32, i32
  }
  func.func @transform_1(%arg0: i32) -> (i32, i32) {
    %c0_i32 = arith.constant 0 : i32
    %c0_i32_0 = arith.constant 0 : i32
    return %arg0, %c0_i32 : i32, i32
  }
  func.func @transform_2(%arg0: i32) -> (i32, i32) {
    %c0_i32 = arith.constant 0 : i32
    %c0_i32_0 = arith.constant 0 : i32
    %c0_i32_1 = arith.constant 0 : i32
    return %c0_i32, %c0_i32_0 : i32, i32
  }
  func.func @transform_3(%arg0: i32) -> (i32, i32) {
    %c0_i32 = arith.constant 0 : i32
    %c0_i32_0 = arith.constant 0 : i32
    %c0_i32_1 = arith.constant 0 : i32
    return %c0_i32, %c0_i32_0 : i32, i32
  }
  func.func @transform_4(%arg0: i32) -> (i32, i32) {
    %c0_i32 = arith.constant 0 : i32
    %c0_i32_0 = arith.constant 0 : i32
    %c0_i32_1 = arith.constant 0 : i32
    return %c0_i32, %c0_i32_0 : i32, i32
  }
  func.func @transform_5(%arg0: i32) -> (i32, i32) {
    %c0_i32 = arith.constant 0 : i32
    %c0_i32_0 = arith.constant 0 : i32
    %c0_i32_1 = arith.constant 0 : i32
    return %c0_i32, %c0_i32_0 : i32, i32
  }
  func.func @transform_6(%arg0: i32) -> (i32, i32) {
    %c0_i32 = arith.constant 0 : i32
    %c0_i32_0 = arith.constant 0 : i32
    %c0_i32_1 = arith.constant 0 : i32
    return %c0_i32, %c0_i32_0 : i32, i32
  }
  func.func @transform_7(%arg0: i32) -> (i32, i32) {
    %c0_i32 = arith.constant 0 : i32
    %c0_i32_0 = arith.constant 0 : i32
    %c0_i32_1 = arith.constant 0 : i32
    return %c0_i32, %c0_i32_0 : i32, i32
  }
  func.func @transform_8(%arg0: i32) -> (i32, i32) {
    %c0_i32 = arith.constant 0 : i32
    %c0_i32_0 = arith.constant 0 : i32
    %c0_i32_1 = arith.constant 0 : i32
    return %c0_i32, %c0_i32_0 : i32, i32
  }
  func.func @transform_9(%arg0: i32) -> (i32, i32) {
    %c0_i32 = arith.constant 0 : i32
    %c0_i32_0 = arith.constant 0 : i32
    return %arg0, %c0_i32 : i32, i32
  }
}

</mosaic_0001>

<llo_original>
// kernel: discriminator_forward.1
$region0: #{discriminator_forward.1}
  #allocation0 [shape = 'u32[]', space=smem, size = 0x4, offset = 0x4, fixed_abs, tag = 'smem constant byte address 0x4 - core index']
  #allocation1 [shape = 'u32[72,128]{1,0:T(1,128)}', space=vmem, size = 0x9000, scoped, tag = 'internal scratch']
  %s0 = inlined_call_operand.hbm [shape: f32[8,16], index: 0, kind: input, shape index: {}]
  %s1 = inlined_call_operand.hbm [shape: f32[8,16], index: 1, kind: input, shape index: {}]
  %s2 = inlined_call_operand.hbm [shape: bf16[16,128], index: 2, kind: input, shape index: {}]
  %s3 = inlined_call_operand.hbm [shape: bf16[16,128], index: 3, kind: input, shape index: {}]
  %s4 = inlined_call_operand.vmem [shape: f32[1,128], index: 4, kind: input, shape index: {}]
  %s5 = inlined_call_operand.hbm [shape: bf16[128,128], index: 5, kind: input, shape index: {}]
  %s6 = inlined_call_operand.vmem [shape: f32[1,128], index: 6, kind: input, shape index: {}]
  %s7 = inlined_call_operand.hbm [shape: bf16[128,128], index: 7, kind: input, shape index: {}]
  %s8 = inlined_call_operand.vmem [shape: f32[1,128], index: 8, kind: input, shape index: {}]
  %s9 = inlined_call_operand.hbm [shape: f32[8,128], index: 9, kind: output, shape index: {}]
  %s10 = sld [smem:[#allocation0]]
  $region70: #{discriminator_forward.1} parent=0
    _
  %s12 = ssub.s32 1, %s10
  %s13 = scalar_select 0, %s12, %s10
  $region1: #{discriminator_forward.1} parent=0
    #allocation2 [shape = 'u8[4096]{0}', space=vmem, size = 0x1000, scoped, tag = 'input window, operand 0, single buffered']
    #allocation3 [shape = 's32[1]{0}', space=sflag, size = 0x4, scoped, tag = 'scoped memory for discriminator_forward.1']
    #allocation4 [shape = 's32[1]{0}', space=sflag, size = 0x4, scoped, tag = 'scoped memory for discriminator_forward.1']
    #allocation5 [shape = 'u8[4096]{0}', space=vmem, size = 0x1000, scoped, tag = 'input window, operand 1, single buffered']
    #allocation6 [shape = 's32[1]{0}', space=sflag, size = 0x4, scoped, tag = 'scoped memory for discriminator_forward.1']
    #allocation7 [shape = 'u8[4096]{0}', space=vmem, size = 0x1000, scoped, tag = 'input window, operand 2, single buffered']
    #allocation8 [shape = 'u8[4096]{0}', space=vmem, size = 0x1000, scoped, tag = 'input window, operand 3, single buffered']
    #allocation9 [shape = 's32[1]{0}', space=sflag, size = 0x4, scoped, tag = 'scoped memory for discriminator_forward.1']
    #allocation10 [shape = 'u8[32768]{0}', space=vmem, size = 0x8000, scoped, tag = 'input window, operand 5, single buffered']
    #allocation11 [shape = 'u8[32768]{0}', space=vmem, size = 0x8000, scoped, tag = 'input window, operand 7, single buffered']
    #allocation12 [shape = 's32[1]{0}', space=sflag, size = 0x4, scoped, tag = 'scoped memory for discriminator_forward.1']
    #allocation13 [shape = 'u8[4096]{0}', space=vmem, size = 0x1000, scoped, tag = 'output window, operand 0, single buffered']
    %14 = vsyncpa [#allocation3], 0
    %15 = vsyncpa [#allocation6], 0
    %16 = vsyncpa [#allocation9], 0
    %17 = vsyncpa [#allocation12], 0
    %18 = vsyncpa [#allocation4], 0
    // Predicated region
    $region2: #{discriminator_forward.1} parent=1 // pred_check
      _
    $region3: #{discriminator_forward.1} parent=1 // pred_check_branch
      %20 = sbr.rel (0) target = $region5
    $region4: #{discriminator_forward.1} parent=1 // pred_region
      %22 = vsyncadd [#allocation3], 0
      %s24 = sshll.u32 %s0, 4
      %s25 = int_to_ptr.hbm [resolvable:$true] %s24
      %s26 = sshll.u32 [#allocation2], 4
      %s27 = int_to_ptr.vmem [resolvable:$true] %s26
      %29 = dma.hbm_to_vmem [thread:$0]  %s25, 128, %s27, [#allocation3]
    $region5: #{discriminator_forward.1} parent=1 // pred_fallthru
      _
    // Predicated region
    $region6: #{discriminator_forward.1} parent=1 // pred_check
      _
    $region7: #{discriminator_forward.1} parent=1 // pred_check_branch
      %31 = sbr.rel (0) target = $region9
    $region8: #{discriminator_forward.1} parent=1 // pred_region
      %33 = vsyncadd [#allocation6], 0
      %s35 = sshll.u32 %s1, 4
      %s36 = int_to_ptr.hbm [resolvable:$true] %s35
      %s37 = sshll.u32 [#allocation5], 4
      %s38 = int_to_ptr.vmem [resolvable:$true] %s37
      %40 = dma.hbm_to_vmem [thread:$0]  %s36, 128, %s38, [#allocation6]
    $region9: #{discriminator_forward.1} parent=1 // pred_fallthru
      _
    // Predicated region
    $region10: #{discriminator_forward.1} parent=1 // pred_check
      _
    $region11: #{discriminator_forward.1} parent=1 // pred_check_branch
      %42 = sbr.rel (0) target = $region13
    $region12: #{discriminator_forward.1} parent=1 // pred_region
      %44 = vsyncadd [#allocation6], 0
      %s45 = sshll.u32 %s2, 4
      %s46 = int_to_ptr.hbm [resolvable:$true] %s45
      %s47 = sshll.u32 [#allocation7], 4
      %s48 = int_to_ptr.vmem [resolvable:$true] %s47
      %53 = dma.hbm_to_vmem [thread:$0]  %s46, 128, %s48, [#allocation6], 64, 64, 4
    $region13: #{discriminator_forward.1} parent=1 // pred_fallthru
      _
    // Predicated region
    $region14: #{discriminator_forward.1} parent=1 // pred_check
      _
    $region15: #{discriminator_forward.1} parent=1 // pred_check_branch
      %55 = sbr.rel (0) target = $region17
    $region16: #{discriminator_forward.1} parent=1 // pred_region
      %57 = vsyncadd [#allocation9], 0
      %s58 = sshll.u32 %s3, 4
      %s59 = int_to_ptr.hbm [resolvable:$true] %s58
      %s60 = sshll.u32 [#allocation8], 4
      %s61 = int_to_ptr.vmem [resolvable:$true] %s60
      %66 = dma.hbm_to_vmem [thread:$0]  %s59, 128, %s61, [#allocation9], 64, 64, 4
    $region17: #{discriminator_forward.1} parent=1 // pred_fallthru
      _
    // Predicated region
    $region18: #{discriminator_forward.1} parent=1 // pred_check
      _
    $region19: #{discriminator_forward.1} parent=1 // pred_check_branch
      %68 = sbr.rel (0) target = $region21
    $region20: #{discriminator_forward.1} parent=1 // pred_region
      _
    $region21: #{discriminator_forward.1} parent=1 // pred_fallthru
      _
    // Predicated region
    $region22: #{discriminator_forward.1} parent=1 // pred_check
      _
    $region23: #{discriminator_forward.1} parent=1 // pred_check_branch
      %70 = sbr.rel (0) target = $region25
    $region24: #{discriminator_forward.1} parent=1 // pred_region
      %72 = vsyncadd [#allocation9], 0
      %s73 = sshll.u32 %s5, 4
      %s74 = int_to_ptr.hbm [resolvable:$true] %s73
      %s75 = sshll.u32 [#allocation10], 4
      %s76 = int_to_ptr.vmem [resolvable:$true] %s75
      %81 = dma.hbm_to_vmem [thread:$0]  %s74, 1024, %s76, [#allocation9], 64, 64, 4
    $region25: #{discriminator_forward.1} parent=1 // pred_fallthru
      _
    // Predicated region
    $region26: #{discriminator_forward.1} parent=1 // pred_check
      _
    $region27: #{discriminator_forward.1} parent=1 // pred_check_branch
      %83 = sbr.rel (0) target = $region29
    $region28: #{discriminator_forward.1} parent=1 // pred_region
      _
    $region29: #{discriminator_forward.1} parent=1 // pred_fallthru
      _
    // Predicated region
    $region30: #{discriminator_forward.1} parent=1 // pred_check
      _
    $region31: #{discriminator_forward.1} parent=1 // pred_check_branch
      %85 = sbr.rel (0) target = $region33
    $region32: #{discriminator_forward.1} parent=1 // pred_region
      %87 = vsyncadd [#allocation12], 0
      %s88 = sshll.u32 %s7, 4
      %s89 = int_to_ptr.hbm [resolvable:$true] %s88
      %s90 = sshll.u32 [#allocation11], 4
      %s91 = int_to_ptr.vmem [resolvable:$true] %s90
      %96 = dma.hbm_to_vmem [thread:$0]  %s89, 1024, %s91, [#allocation12], 64, 64, 4
    $region33: #{discriminator_forward.1} parent=1 // pred_fallthru
      _
    // Predicated region
    $region34: #{discriminator_forward.1} parent=1 // pred_check
      _
    $region35: #{discriminator_forward.1} parent=1 // pred_check_branch
      %98 = sbr.rel (0) target = $region37
    $region36: #{discriminator_forward.1} parent=1 // pred_region
      _
    $region37: #{discriminator_forward.1} parent=1 // pred_fallthru
      _
    // Predicated region
    $region38: #{discriminator_forward.1} parent=1 // pred_check
      _
    $region39: #{discriminator_forward.1} parent=1 // pred_check_branch
      %100 = sbr.rel (0) target = $region41
    $region40: #{discriminator_forward.1} parent=1 // pred_region
      %102 = dma.done [#allocation3], 128
    $region41: #{discriminator_forward.1} parent=1 // pred_fallthru
      _
    // Predicated region
    $region42: #{discriminator_forward.1} parent=1 // pred_check
      _
    $region43: #{discriminator_forward.1} parent=1 // pred_check_branch
      %104 = sbr.rel (0) target = $region45
    $region44: #{discriminator_forward.1} parent=1 // pred_region
      %106 = dma.done [#allocation6], 128
    $region45: #{discriminator_forward.1} parent=1 // pred_fallthru
      _
    // Predicated region
    $region46: #{discriminator_forward.1} parent=1 // pred_check
      _
    $region47: #{discriminator_forward.1} parent=1 // pred_check_branch
      %108 = sbr.rel (0) target = $region49
    $region48: #{discriminator_forward.1} parent=1 // pred_region
      %110 = dma.done [#allocation6], 128
    $region49: #{discriminator_forward.1} parent=1 // pred_fallthru
      _
    // Predicated region
    $region50: #{discriminator_forward.1} parent=1 // pred_check
      _
    $region51: #{discriminator_forward.1} parent=1 // pred_check_branch
      %112 = sbr.rel (0) target = $region53
    $region52: #{discriminator_forward.1} parent=1 // pred_region
      %114 = dma.done [#allocation9], 128
    $region53: #{discriminator_forward.1} parent=1 // pred_fallthru
      _
    // Predicated region
    $region54: #{discriminator_forward.1} parent=1 // pred_check
      _
    $region55: #{discriminator_forward.1} parent=1 // pred_check_branch
      %116 = sbr.rel (0) target = $region57
    $region56: #{discriminator_forward.1} parent=1 // pred_region
      %118 = dma.done [#allocation9], 1024
    $region57: #{discriminator_forward.1} parent=1 // pred_fallthru
      _
    // Predicated region
    $region58: #{discriminator_forward.1} parent=1 // pred_check
      _
    $region59: #{discriminator_forward.1} parent=1 // pred_check_branch
      %120 = sbr.rel (0) target = $region61
    $region60: #{discriminator_forward.1} parent=1 // pred_region
      %122 = dma.done [#allocation12], 1024
    $region61: #{discriminator_forward.1} parent=1 // pred_fallthru
      _
    %v124 = vld [vmem:[#allocation2] sm:$0xff]
    %v125 = vpack.c.bf16 %v124, %v124
    %v126 = vld [vmem:[#allocation5] sm:$0xff]
    %v127 = vpack.c.bf16 %v126, %v126
    %v128 = vld [vmem:[#allocation7] sm:$0xf]
    %v129 = vld [vmem:[#allocation7 + $0x4] sm:$0xf]
    %v130 = vld [vmem:[#allocation8] sm:$0xf]
    %v131 = vld [vmem:[#allocation8 + $0x4] sm:$0xf]
    %v134 = vunpack.c.l.b16 %v130
    %v135 = vunpack.c.l.b16 %v131
    %v136 = vpack.c.b16 %v135, %v134
    %vm138 = vcmask 130048
    %v140 = vsel %vm138, %v127, 0
    %142 = vmatpush.bf16.msra.mxu0 0
    %143 = vmatpush.bf16.msra.mxu0 0
    %144 = vmatpush.bf16.msra.mxu0 0
    %145 = vmatpush.bf16.msra.mxu0 0
    %146 = vmatpush.bf16.msra.mxu0 0
    %147 = vmatpush.bf16.msra.mxu0 0
    %148 = vmatpush.bf16.msra.mxu0 0
    %149 = vmatpush.bf16.msra.mxu0 %v136
    %150 = vmatmul.bf16.gmra.mxu0 %v140
    %v151 = vpop.f32.mrf.mxu0
    %v152 = vadd.f32 0.0, %v151
    %v153 = vpop.f32.mrf.mxu0
    %154 = vdwg.mxu0
    %v157 = vunpack.c.l.b16 %v128
    %v158 = vunpack.c.l.b16 %v129
    %v159 = vpack.c.b16 %v158, %v157
    %v162 = vsel %vm138, %v125, 0
    %164 = vmatpush.bf16.msra.mxu0 0
    %165 = vmatpush.bf16.msra.mxu0 0
    %166 = vmatpush.bf16.msra.mxu0 0
    %167 = vmatpush.bf16.msra.mxu0 0
    %168 = vmatpush.bf16.msra.mxu0 0
    %169 = vmatpush.bf16.msra.mxu0 0
    %170 = vmatpush.bf16.msra.mxu0 0
    %171 = vmatpush.bf16.msra.mxu0 %v159
    %172 = vmatmul.bf16.gmra.mxu0 %v162
    %v173 = vpop.f32.mrf.mxu0
    %v174 = vadd.f32 %v152, %v173
    %v175 = vpop.f32.mrf.mxu0
    %176 = vdwg.mxu0
    %v177 = vld [vmem:[%s4] sm:$0x1]
    %v179 = vperm.slane %v177, 0
    %v181 = vadd.f32 %v174, %v179
    %v182 = vmax.f32 %v181, 0.0
    %v183 = vpack.c.bf16 %v182, %v182
    %v184 = vld [vmem:[#allocation10] sm:$0xf]
    %v185 = vld [vmem:[#allocation10 + $0x4] sm:$0xf]
    %v186 = vld [vmem:[#allocation10 + $0x8] sm:$0xf]
    %v187 = vld [vmem:[#allocation10 + $0xc] sm:$0xf]
    %v188 = vld [vmem:[#allocation10 + $0x10] sm:$0xf]
    %v189 = vld [vmem:[#allocation10 + $0x14] sm:$0xf]
    %v190 = vld [vmem:[#allocation10 + $0x18] sm:$0xf]
    %v191 = vld [vmem:[#allocation10 + $0x1c] sm:$0xf]
    %v192 = vld [vmem:[#allocation10 + $0x20] sm:$0xf]
    %v193 = vld [vmem:[#allocation10 + $0x24] sm:$0xf]
    %v194 = vld [vmem:[#allocation10 + $0x28] sm:$0xf]
    %v195 = vld [vmem:[#allocation10 + $0x2c] sm:$0xf]
    %v196 = vld [vmem:[#allocation10 + $0x30] sm:$0xf]
    %v197 = vld [vmem:[#allocation10 + $0x34] sm:$0xf]
    %v198 = vld [vmem:[#allocation10 + $0x38] sm:$0xf]
    %v199 = vld [vmem:[#allocation10 + $0x3c] sm:$0xf]
    %v200 = vld [vmem:[%s6] sm:$0x1]
    %v202 = vperm.slane %v200, 0
    %v220 = vunpack.c.l.b16 %v184
    %v221 = vunpack.c.l.b16 %v185
    %v222 = vunpack.c.l.b16 %v186
    %v223 = vunpack.c.l.b16 %v187
    %v224 = vunpack.c.l.b16 %v188
    %v225 = vunpack.c.l.b16 %v189
    %v226 = vunpack.c.l.b16 %v190
    %v227 = vunpack.c.l.b16 %v191
    %v228 = vunpack.c.l.b16 %v192
    %v229 = vunpack.c.l.b16 %v193
    %v230 = vunpack.c.l.b16 %v194
    %v231 = vunpack.c.l.b16 %v195
    %v232 = vunpack.c.l.b16 %v196
    %v233 = vunpack.c.l.b16 %v197
    %v234 = vunpack.c.l.b16 %v198
    %v235 = vunpack.c.l.b16 %v199
    %v236 = vpack.c.b16 %v221, %v220
    %v237 = vpack.c.b16 %v223, %v222
    %v238 = vpack.c.b16 %v225, %v224
    %v239 = vpack.c.b16 %v227, %v226
    %v240 = vpack.c.b16 %v229, %v228
    %v241 = vpack.c.b16 %v231, %v230
    %v242 = vpack.c.b16 %v233, %v232
    %v243 = vpack.c.b16 %v235, %v234
    %252 = vmatpush.bf16.msra.mxu0 %v243
    %253 = vmatpush.bf16.msra.mxu0 %v242
    %254 = vmatpush.bf16.msra.mxu0 %v241
    %255 = vmatpush.bf16.msra.mxu0 %v240
    %256 = vmatpush.bf16.msra.mxu0 %v239
    %257 = vmatpush.bf16.msra.mxu0 %v238
    %258 = vmatpush.bf16.msra.mxu0 %v237
    %259 = vmatpush.bf16.msra.mxu0 %v236
    %260 = vmatmul.bf16.gmra.mxu0 %v183
    %v261 = vpop.f32.mrf.mxu0
    %v262 = vadd.f32 %v202, %v261
    %v263 = vpop.f32.mrf.mxu0
    %264 = vdwg.mxu0
    %v265 = vmax.f32 %v262, 0.0
    %v266 = vpack.c.bf16 %v265, %v265
    %v267 = vld [vmem:[#allocation11] sm:$0xf]
    %v268 = vld [vmem:[#allocation11 + $0x4] sm:$0xf]
    %v269 = vld [vmem:[#allocation11 + $0x8] sm:$0xf]
    %v270 = vld [vmem:[#allocation11 + $0xc] sm:$0xf]
    %v271 = vld [vmem:[#allocation11 + $0x10] sm:$0xf]
    %v272 = vld [vmem:[#allocation11 + $0x14] sm:$0xf]
    %v273 = vld [vmem:[#allocation11 + $0x18] sm:$0xf]
    %v274 = vld [vmem:[#allocation11 + $0x1c] sm:$0xf]
    %v275 = vld [vmem:[#allocation11 + $0x20] sm:$0xf]
    %v276 = vld [vmem:[#allocation11 + $0x24] sm:$0xf]
    %v277 = vld [vmem:[#allocation11 + $0x28] sm:$0xf]
    %v278 = vld [vmem:[#allocation11 + $0x2c] sm:$0xf]
    %v279 = vld [vmem:[#allocation11 + $0x30] sm:$0xf]
    %v280 = vld [vmem:[#allocation11 + $0x34] sm:$0xf]
    %v281 = vld [vmem:[#allocation11 + $0x38] sm:$0xf]
    %v282 = vld [vmem:[#allocation11 + $0x3c] sm:$0xf]
    %v283 = vld [vmem:[%s8] sm:$0x1]
    %v285 = vperm.slane %v283, 0
    %v303 = vunpack.c.l.b16 %v267
    %v304 = vunpack.c.l.b16 %v268
    %v305 = vunpack.c.l.b16 %v269
    %v306 = vunpack.c.l.b16 %v270
    %v307 = vunpack.c.l.b16 %v271
    %v308 = vunpack.c.l.b16 %v272
    %v309 = vunpack.c.l.b16 %v273
    %v310 = vunpack.c.l.b16 %v274
    %v311 = vunpack.c.l.b16 %v275
    %v312 = vunpack.c.l.b16 %v276
    %v313 = vunpack.c.l.b16 %v277
    %v314 = vunpack.c.l.b16 %v278
    %v315 = vunpack.c.l.b16 %v279
    %v316 = vunpack.c.l.b16 %v280
    %v317 = vunpack.c.l.b16 %v281
    %v318 = vunpack.c.l.b16 %v282
    %v319 = vpack.c.b16 %v304, %v303
    %v320 = vpack.c.b16 %v306, %v305
    %v321 = vpack.c.b16 %v308, %v307
    %v322 = vpack.c.b16 %v310, %v309
    %v323 = vpack.c.b16 %v312, %v311
    %v324 = vpack.c.b16 %v314, %v313
    %v325 = vpack.c.b16 %v316, %v315
    %v326 = vpack.c.b16 %v318, %v317
    %335 = vmatpush.bf16.msra.mxu0 %v326
    %336 = vmatpush.bf16.msra.mxu0 %v325
    %337 = vmatpush.bf16.msra.mxu0 %v324
    %338 = vmatpush.bf16.msra.mxu0 %v323
    %339 = vmatpush.bf16.msra.mxu0 %v322
    %340 = vmatpush.bf16.msra.mxu0 %v321
    %341 = vmatpush.bf16.msra.mxu0 %v320
    %342 = vmatpush.bf16.msra.mxu0 %v319
    %343 = vmatmul.bf16.gmra.mxu0 %v266
    %v344 = vpop.f32.mrf.mxu0
    %v345 = vadd.f32 %v285, %v344
    %v346 = vpop.f32.mrf.mxu0
    %347 = vdwg.mxu0
    %v348 = vsub.f32 0.0, %v345
    %v349 = vmul.f32 %v348, 1.442695
    %v350 = vpow.pop %v349
    %v351 = vadd.f32 %v350, 1.0
    %v352 = vrcp.pop %v351
    %353 = vst [vmem:[#allocation13] sm:$0xff] %v352
    // Predicated region
    $region62: #{discriminator_forward.1} parent=1 // pred_check
      _
    $region63: #{discriminator_forward.1} parent=1 // pred_check_branch
      %355 = sbr.rel (0) target = $region65
    $region64: #{discriminator_forward.1} parent=1 // pred_region
      %357 = vsyncadd [#allocation4], 0
      %s359 = sshll.u32 [#allocation13], 4
      %s360 = int_to_ptr.vmem [resolvable:$true] %s359
      %s361 = sshll.u32 %s9, 4
      %s362 = int_to_ptr.hbm [resolvable:$true] %s361
      %364 = dma.vmem_to_hbm [thread:$0]  %s360, 128, %s362, [#allocation4]
    $region65: #{discriminator_forward.1} parent=1 // pred_fallthru
      _
    // Predicated region
    $region66: #{discriminator_forward.1} parent=1 // pred_check
      _
    $region67: #{discriminator_forward.1} parent=1 // pred_check_branch
      %366 = sbr.rel (0) target = $region69
    $region68: #{discriminator_forward.1} parent=1 // pred_region
      %368 = dma.done [#allocation4], 128
    $region69: #{discriminator_forward.1} parent=1 // pred_fallthru
      _
    %369 = vsyncpa [#allocation3], 1
    %370 = vsyncpa [#allocation6], 1
    %371 = vsyncpa [#allocation9], 1
    %372 = vsyncpa [#allocation12], 1
    %373 = vsyncpa [#allocation4], 1

</llo_original>
